<compile_context>
chip_gen: v5e
topology: v5e:2x2
jax: 0.10.0
libtpu: 0.0.40
codegen_flags: <defaults>
</compile_context>

<pallas_src>
import jax
import jax.numpy as jnp
from jax.experimental import pallas as pl
from jax.experimental.pallas import tpu as pltpu


def self_attention_kernel(v_ref, q_ref, w_ref, b_ref, hw_ref, out_ref):
    # Block shapes (all static):
    #   v_ref  (BB, v_num, F)     q_ref  (BB, q_num, F)
    #   w_ref  (F, 2*Hp)          b_ref  (1, 2*Hp)     hw_ref (G, Hp)
    #   out_ref (BB, G, v_num, q_num)
    bb, v_num, f = v_ref.shape
    _, q_num, _ = q_ref.shape
    n_g, hp = hw_ref.shape

    # Fold all batch rows into one M dimension (leading-dim reshape: lane dim
    # unchanged, no relayout) and run BOTH FCNet projections as a single fused
    # MXU matmul: v columns live in [0, Hp), q columns in [Hp, 2*Hp).
    v2 = v_ref[...].reshape(bb * v_num, f)
    q2 = q_ref[...].reshape(bb * q_num, f)
    x = jnp.concatenate([v2, q2], axis=0)                  # (bb*(v_num+q_num), F)
    proj = jnp.maximum(
        jnp.dot(x, w_ref[...], preferred_element_type=jnp.float32) + b_ref[...],
        0.0)                                               # (rows, 2*Hp)

    # Lane-aligned column halves (Hp is a multiple of 128) and sublane-aligned
    # row split (v_num, q_num multiples of 8, asserted in the wrapper).
    v_proj = proj[:bb * v_num, :hp].reshape(bb, v_num, hp)   # (bb, v_num, Hp)
    q_proj = proj[bb * v_num:, hp:].reshape(bb, q_num, hp)   # (bb, q_num, Hp)

    # Per-glimpse scaling of v_proj with all glimpses stacked along M, so the
    # logits contraction is ONE batched MXU matmul (contract Hp, batch bb).
    hw = hw_ref[...]                                         # (G, Hp)
    v_all = (v_proj[:, None, :, :] * hw[None, :, None, :]    # (bb, G, v_num, Hp)
             ).reshape(bb, n_g * v_num, hp)
    logits = jax.lax.dot_general(
        v_all, q_proj,
        dimension_numbers=(((2,), (2,)), ((0,), (0,))),
        preferred_element_type=jnp.float32)                  # (bb, G*v_num, q_num)
    logits = logits.reshape(bb, n_g, v_num, q_num)

    # NOTE: the module's h_bias is constant across the flattened (v_num*q_num)
    # softmax axis for every (batch, glimpse), so softmax shift-invariance
    # cancels it exactly -- it is intentionally not added here.

    # Softmax over the flattened (v_num * q_num) block, per (batch, glimpse).
    m = jnp.max(jnp.max(logits, axis=3, keepdims=True), axis=2, keepdims=True)
    e = jnp.exp(logits - m)
    s = jnp.sum(jnp.sum(e, axis=3, keepdims=True), axis=2, keepdims=True)
    r = pl.reciprocal(s, approx=True)                        # EUP slot
    r = r * (2.0 - s * r)                                    # one Newton step -> f32 accurate
    out_ref[...] = (e * r).astype(out_ref.dtype)


def _round_up(x, m):
    return ((x + m - 1) // m) * m


def self_attention(v, q, wv_t, bv, wq_t, bq, h_weight, h_bias, glimpses,
                   batch_per_step=None):
    B, v_num, Fv = v.shape
    _, q_num, Fq = q.shape
    H = wv_t.shape[1]
    G = glimpses

    # In-kernel leading-dim reshapes / sublane row splits require the f32
    # sublane tile (8) to divide these.
    assert v_num % 8 == 0 and q_num % 8 == 0, (v_num, q_num)

    # ---- wrapper-side layout prep (tiny, one-shot XLA ops) -----------------
    # Pad H to a full 128-lane multiple; zero columns are inert through
    # bias+ReLU, hw scaling and the H contraction, so results are unchanged.
    Hp = _round_up(H, 128)
    # Common input-feature dim so both projections share one weight block
    # (zero feature columns x zero weight rows contribute nothing).
    F = max(Fv, Fq)

    def pad2(w, rows, cols):
        return jnp.pad(w, ((0, rows - w.shape[0]), (0, cols - w.shape[1])))

    wv_p = pad2(wv_t, F, Hp)                                 # (F, Hp)
    wq_p = pad2(wq_t, F, Hp)                                 # (F, Hp)
    bv_p = pad2(bv.reshape(1, H), 1, Hp)                     # (1, Hp)
    bq_p = pad2(bq.reshape(1, H), 1, Hp)                     # (1, Hp)
    w_comb = jnp.concatenate([wv_p, wq_p], axis=1)           # (F, 2*Hp)
    b_comb = jnp.concatenate([bv_p, bq_p], axis=1)           # (1, 2*Hp)
    hw_p = pad2(h_weight.reshape(G, H), G, Hp)               # (G, Hp)
    del h_bias  # cancels exactly under the per-(batch, glimpse) softmax

    v_in = v if Fv == F else jnp.pad(v, ((0, 0), (0, 0), (0, F - Fv)))
    q_in = q if Fq == F else jnp.pad(q, ((0, 0), (0, 0), (0, F - Fq)))

    # ---- grid heuristic ----------------------------------------------------
    # v5e/v6e have a single TensorCore: a multi-step grid is purely serial, so
    # default to ONE step.  Only split 2-way (v7x's two TCs) when each step
    # carries enough matmul rows to hide the cross-core launch cost.
    if batch_per_step is None:
        rows_if_split = (B // 2) * (v_num + q_num)
        if B % 2 == 0 and rows_if_split >= 256:
            batch_per_step = B // 2
        else:
            batch_per_step = B
    assert B % batch_per_step == 0
    num_steps = B // batch_per_step

    flops = 2 * B * ((v_num + q_num) * F * 2 * Hp + G * v_num * q_num * Hp)
    bytes_accessed = 4 * (v_in.size + q_in.size + w_comb.size + b_comb.size
                          + hw_p.size + B * G * v_num * q_num)
    cost = pl.CostEstimate(flops=flops,
                           transcendentals=B * G * v_num * q_num,
                           bytes_accessed=bytes_accessed)

    return pl.pallas_call(
        self_attention_kernel,
        out_shape=jax.ShapeDtypeStruct((B, G, v_num, q_num), jnp.float32),
        grid_spec=pltpu.PrefetchScalarGridSpec(
            num_scalar_prefetch=0,
            grid=(num_steps,),
            in_specs=[
                pl.BlockSpec((batch_per_step, v_num, F), lambda s: (s, 0, 0)),
                pl.BlockSpec((batch_per_step, q_num, F), lambda s: (s, 0, 0)),
                # Grid-invariant operands: constant block index => DMA'd once,
                # not re-fetched on later steps.
                pl.BlockSpec((F, 2 * Hp), lambda s: (0, 0)),
                pl.BlockSpec((1, 2 * Hp), lambda s: (0, 0)),
                pl.BlockSpec((G, Hp), lambda s: (0, 0)),
            ],
            out_specs=pl.BlockSpec((batch_per_step, G, v_num, q_num),
                                   lambda s: (s, 0, 0, 0)),
        ),
        compiler_params=pltpu.CompilerParams(
            dimension_semantics=("parallel",),
            # Working set is tens of KiB; 32 MiB scoped budget is safe on all
            # generations (v7x physical VMEM is 64 MiB).
            vmem_limit_bytes=32 * 1024 * 1024,
        ),
        cost_estimate=cost,
    )(v_in, q_in, w_comb, b_comb, hw_p)


def fold_weight_norm(v_weight, g_scalar):
    # weight_norm(nn.Linear, dim=None): W = g * V / ||V||_F  (scalar g)
    return g_scalar * v_weight / jnp.sqrt(jnp.sum(v_weight ** 2))


def reference(v, q, wv_t, bv, wq_t, bq, hw, hb, glimpses):
    # Pure-JAX reference mirroring the PyTorch forward (h_bias included).
    v_ = jnp.maximum(v @ wv_t + bv, 0.0)[:, None]            # (B,1,v_num,H)
    q_ = jnp.maximum(q @ wq_t + bq, 0.0)[:, None]            # (B,1,q_num,H)
    h_ = v_ * hw.reshape(1, glimpses, 1, -1)                 # (B,G,v_num,H)
    logits = h_ @ jnp.swapaxes(q_, 2, 3) + hb.reshape(1, glimpses, 1, 1)
    B, G, vn, qn = logits.shape
    att = jax.nn.softmax(logits.reshape(B, G, vn * qn), axis=2)
    return att.reshape(B, G, vn, qn)


if __name__ == "__main__":
    # Small shapes consistent with the module
    B = 2
    v_num, q_num = 16, 8
    v_features, q_features = 32, 32
    mid_features = 32
    glimpses = 2
    hidden_aug = 3
    H = int(mid_features * hidden_aug)                       # 96

    key = jax.random.PRNGKey(0)
    keys = jax.random.split(key, 10)

    v_in = jax.random.normal(keys[0], (B, v_num, v_features), jnp.float32)
    q_in = jax.random.normal(keys[1], (B, q_num, q_features), jnp.float32)

    # lin_v: weight_norm(Linear(v_features, H), dim=None) -> raw V, scalar g
    wv_raw = jax.random.normal(keys[2], (H, v_features), jnp.float32) * 0.1
    gv = jnp.float32(1.3)
    bv = jax.random.normal(keys[3], (1, H), jnp.float32) * 0.1
    # lin_q
    wq_raw = jax.random.normal(keys[4], (H, q_features), jnp.float32) * 0.1
    gq = jnp.float32(0.8)
    bq = jax.random.normal(keys[5], (1, H), jnp.float32) * 0.1
    # h_weight (1, G, 1, H) and h_bias (1, G, 1, 1) from normal_()
    h_weight = jax.random.normal(keys[6], (glimpses, H), jnp.float32)
    h_bias = jax.random.normal(keys[7], (glimpses, 1), jnp.float32)

    # Fold weight norm and pre-transpose (kernel computes x @ W^T as x @ W_t)
    wv_t = fold_weight_norm(wv_raw, gv).T                    # (v_features, H)
    wq_t = fold_weight_norm(wq_raw, gq).T                    # (q_features, H)

    out = self_attention(v_in, q_in, wv_t, bv, wq_t, bq, h_weight, h_bias,
                         glimpses)
    out = jax.block_until_ready(out)

    ref = reference(v_in, q_in, wv_t, bv, wq_t, bq, h_weight, h_bias, glimpses)
    assert out.shape == (B, glimpses, v_num, q_num)
    assert jnp.allclose(out, ref, atol=1e-5, rtol=1e-5), "mismatch vs reference"

    print("KERNEL_OK")
</pallas_src>

<mosaic_0001>
module attributes {stable_mosaic.version = 11 : i64} {
  func.func @self_attention_kernel(%arg0: i32, %arg1: memref<2x16x32xf32, #tpu.memory_space<vmem>>, %arg2: memref<2x8x32xf32, #tpu.memory_space<vmem>>, %arg3: memref<32x256xf32, #tpu.memory_space<vmem>>, %arg4: memref<1x256xf32, #tpu.memory_space<vmem>>, %arg5: memref<2x128xf32, #tpu.memory_space<vmem>>, %arg6: memref<2x2x16x8xf32, #tpu.memory_space<vmem>>) attributes {dimension_semantics = [#tpu.dimension_semantics<parallel>], iteration_bounds = array<i64: 1>, scalar_prefetch = 0 : i64, scratch_operands = 0 : i64, tpu.core_type = #tpu.core_type<tc>, window_params = [{transform_indices = @transform_0, window_bounds = array<i64: 2, 16, 32>}, {transform_indices = @transform_1, window_bounds = array<i64: 2, 8, 32>}, {pipeline_mode = #tpu.pipeline_mode<synchronous>, transform_indices = @transform_2, window_bounds = array<i64: 32, 256>}, {pipeline_mode = #tpu.pipeline_mode<synchronous>, transform_indices = @transform_3, window_bounds = array<i64: 1, 256>}, {pipeline_mode = #tpu.pipeline_mode<synchronous>, transform_indices = @transform_4, window_bounds = array<i64: 2, 128>}, {transform_indices = @transform_5, window_bounds = array<i64: 2, 2, 16, 8>}]} {
    %c0 = arith.constant 0 : index
    %c0_0 = arith.constant 0 : index
    %c0_1 = arith.constant 0 : index
    %0 = vector.load %arg1[%c0, %c0_0, %c0_1] : memref<2x16x32xf32, #tpu.memory_space<vmem>>, vector<2x16x32xf32>
    %1 = vector.shape_cast %0 : vector<2x16x32xf32> to vector<32x32xf32>
    %c0_2 = arith.constant 0 : index
    %c0_3 = arith.constant 0 : index
    %c0_4 = arith.constant 0 : index
    %2 = vector.load %arg2[%c0_2, %c0_3, %c0_4] : memref<2x8x32xf32, #tpu.memory_space<vmem>>, vector<2x8x32xf32>
    %3 = vector.shape_cast %2 : vector<2x8x32xf32> to vector<16x32xf32>
    %4 = tpu.concatenate %1, %3 in 0 : vector<32x32xf32>, vector<16x32xf32> -> vector<48x32xf32>
    %c0_5 = arith.constant 0 : index
    %c0_6 = arith.constant 0 : index
    %5 = vector.load %arg3[%c0_5, %c0_6] : memref<32x256xf32, #tpu.memory_space<vmem>>, vector<32x256xf32>
    %cst = arith.constant dense<0.000000e+00> : vector<48x256xf32>
    %6 = tpu.matmul %4, %5, %cst {dimension_numbers = #tpu.dot_dimension_numbers<[1], [0], [0], [1], [0, 0, 1, 1], [], []>} : vector<48x32xf32>, vector<32x256xf32>, vector<48x256xf32> -> vector<48x256xf32>
    %c0_7 = arith.constant 0 : index
    %c0_8 = arith.constant 0 : index
    %7 = vector.load %arg4[%c0_7, %c0_8] : memref<1x256xf32, #tpu.memory_space<vmem>>, vector<1x256xf32>
    %8 = vector.broadcast %7 : vector<1x256xf32> to vector<48x256xf32>
    %9 = arith.addf %6, %8 : vector<48x256xf32>
    %cst_9 = arith.constant 0.000000e+00 : f32
    %10 = vector.broadcast %cst_9 : f32 to vector<48x256xf32>
    %11 = arith.maximumf %9, %10 : vector<48x256xf32>
    %12 = vector.extract_strided_slice %11 {offsets = [0, 0], sizes = [32, 128], strides = [1, 1]} : vector<48x256xf32> to vector<32x128xf32>
    %13 = vector.shape_cast %12 : vector<32x128xf32> to vector<2x16x128xf32>
    %14 = vector.extract_strided_slice %11 {offsets = [32, 128], sizes = [16, 128], strides = [1, 1]} : vector<48x256xf32> to vector<16x128xf32>
    %15 = vector.shape_cast %14 : vector<16x128xf32> to vector<2x8x128xf32>
    %c0_10 = arith.constant 0 : index
    %c0_11 = arith.constant 0 : index
    %16 = vector.load %arg5[%c0_10, %c0_11] : memref<2x128xf32, #tpu.memory_space<vmem>>, vector<2x128xf32>
    %17 = vector.shape_cast %13 : vector<2x16x128xf32> to vector<2x1x16x128xf32>
    %18 = vector.shape_cast %16 : vector<2x128xf32> to vector<1x2x1x128xf32>
    %19 = vector.broadcast %17 : vector<2x1x16x128xf32> to vector<2x2x16x128xf32>
    %20 = vector.broadcast %18 : vector<1x2x1x128xf32> to vector<2x2x16x128xf32>
    %21 = arith.mulf %19, %20 : vector<2x2x16x128xf32>
    %22 = vector.shape_cast %21 : vector<2x2x16x128xf32> to vector<2x32x128xf32>
    %cst_12 = arith.constant dense<0.000000e+00> : vector<2x32x8xf32>
    %23 = tpu.matmul %22, %15, %cst_12 {dimension_numbers = #tpu.dot_dimension_numbers<[2], [2], [1], [1], [0, 0, 0, 1, 1, 1], [0], [0]>} : vector<2x32x128xf32>, vector<2x8x128xf32>, vector<2x32x8xf32> -> vector<2x32x8xf32>
    %24 = vector.shape_cast %23 : vector<2x32x8xf32> to vector<2x2x16x8xf32>
    %cst_13 = arith.constant dense<0xFF800000> : vector<2x2x16xf32>
    %25 = vector.multi_reduction <maximumf>, %24, %cst_13 [3] : vector<2x2x16x8xf32> to vector<2x2x16xf32>
    %26 = vector.shape_cast %25 : vector<2x2x16xf32> to vector<2x2x16x1xf32>
    %cst_14 = arith.constant dense<0xFF800000> : vector<2x2x1xf32>
    %27 = vector.multi_reduction <maximumf>, %26, %cst_14 [2] : vector<2x2x16x1xf32> to vector<2x2x1xf32>
    %28 = vector.shape_cast %27 : vector<2x2x1xf32> to vector<2x2x1x1xf32>
    %29 = vector.broadcast %28 : vector<2x2x1x1xf32> to vector<2x2x16x8xf32>
    %30 = arith.subf %24, %29 : vector<2x2x16x8xf32>
    %31 = math.exp %30 : vector<2x2x16x8xf32>
    %cst_15 = arith.constant dense<0.000000e+00> : vector<2x2x16xf32>
    %32 = vector.multi_reduction <add>, %31, %cst_15 [3] : vector<2x2x16x8xf32> to vector<2x2x16xf32>
    %33 = vector.shape_cast %32 : vector<2x2x16xf32> to vector<2x2x16x1xf32>
    %cst_16 = arith.constant dense<0.000000e+00> : vector<2x2x1xf32>
    %34 = vector.multi_reduction <add>, %33, %cst_16 [2] : vector<2x2x16x1xf32> to vector<2x2x1xf32>
    %35 = vector.shape_cast %34 : vector<2x2x1xf32> to vector<2x2x1x1xf32>
    %36 = tpu.reciprocal %35 {approx = true} : vector<2x2x1x1xf32> -> vector<2x2x1x1xf32>
    %37 = arith.mulf %35, %36 : vector<2x2x1x1xf32>
    %cst_17 = arith.constant 2.000000e+00 : f32
    %38 = vector.broadcast %cst_17 : f32 to vector<2x2x1x1xf32>
    %39 = arith.subf %38, %37 : vector<2x2x1x1xf32>
    %40 = arith.mulf %36, %39 : vector<2x2x1x1xf32>
    %41 = vector.broadcast %40 : vector<2x2x1x1xf32> to vector<2x2x16x8xf32>
    %42 = arith.mulf %31, %41 : vector<2x2x16x8xf32>
    %c0_18 = arith.constant 0 : index
    %c0_19 = arith.constant 0 : index
    %c0_20 = arith.constant 0 : index
    %c0_21 = arith.constant 0 : index
    %43 = vector.load %arg6[%c0_18, %c0_19, %c0_20, %c0_21] : memref<2x2x16x8xf32, #tpu.memory_space<vmem>>, vector<2x2x16x8xf32>
    tpu.vector_store %arg6[%c0_18, %c0_19, %c0_20, %c0_21], %42 {strides = array<i32>} : memref<2x2x16x8xf32, #tpu.memory_space<vmem>>, vector<2x2x16x8xf32>,
    return
  }
  func.func @transform_0(%arg0: i32) -> (i32, i32, i32) {
    %c0_i32 = arith.constant 0 : i32
    %c0_i32_0 = arith.constant 0 : i32
    %c0_i32_1 = arith.constant 0 : i32
    return %arg0, %c0_i32, %c0_i32_0 : i32, i32, i32
  }
  func.func @transform_1(%arg0: i32) -> (i32, i32, i32) {
    %c0_i32 = arith.constant 0 : i32
    %c0_i32_0 = arith.constant 0 : i32
    %c0_i32_1 = arith.constant 0 : i32
    return %arg0, %c0_i32, %c0_i32_0 : i32, i32, i32
  }
  func.func @transform_2(%arg0: i32) -> (i32, i32) {
    %c0_i32 = arith.constant 0 : i32
    %c0_i32_0 = arith.constant 0 : i32
    %c0_i32_1 = arith.constant 0 : i32
    return %c0_i32, %c0_i32_0 : i32, i32
  }
  func.func @transform_3(%arg0: i32) -> (i32, i32) {
    %c0_i32 = arith.constant 0 : i32
    %c0_i32_0 = arith.constant 0 : i32
    %c0_i32_1 = arith.constant 0 : i32
    return %c0_i32, %c0_i32_0 : i32, i32
  }
  func.func @transform_4(%arg0: i32) -> (i32, i32) {
    %c0_i32 = arith.constant 0 : i32
    %c0_i32_0 = arith.constant 0 : i32
    %c0_i32_1 = arith.constant 0 : i32
    return %c0_i32, %c0_i32_0 : i32, i32
  }
  func.func @transform_5(%arg0: i32) -> (i32, i32, i32, i32) {
    %c0_i32 = arith.constant 0 : i32
    %c0_i32_0 = arith.constant 0 : i32
    %c0_i32_1 = arith.constant 0 : i32
    %c0_i32_2 = arith.constant 0 : i32
    return %arg0, %c0_i32, %c0_i32_0, %c0_i32_1 : i32, i32, i32, i32
  }
}

</mosaic_0001>

<llo_original>
// kernel: tpu_custom_call.1
$region0: #{tpu_custom_call.1}
  #allocation0 [shape = 'u32[]', space=smem, size = 0x4, offset = 0x4, fixed_abs, tag = 'smem constant byte address 0x4 - core index']
  #allocation1 [shape = 'u32[72,128]{1,0:T(1,128)}', space=vmem, size = 0x9000, scoped, tag = 'internal scratch']
  %s0 = inlined_call_operand.hbm [shape: f32[2,16,32], index: 0, kind: input, shape index: {}]
  %s1 = inlined_call_operand.hbm [shape: f32[2,8,32], index: 1, kind: input, shape index: {}]
  %s2 = inlined_call_operand.hbm [shape: f32[32,256], index: 2, kind: input, shape index: {}]
  %s3 = inlined_call_operand.vmem [shape: f32[1,256], index: 3, kind: input, shape index: {}]
  %s4 = inlined_call_operand.hbm [shape: f32[2,128], index: 4, kind: input, shape index: {}]
  %s5 = inlined_call_operand.vmem [shape: f32[2,2,16,8], index: 5, kind: output, shape index: {}]
  %s6 = sld [smem:[#allocation0]]
  $region46: #{tpu_custom_call.1} parent=0
    _
  %s8 = ssub.s32 1, %s6
  %s9 = scalar_select 0, %s8, %s6
  $region1: #{tpu_custom_call.1} parent=0
    #allocation2 [shape = 'u8[16384]{0}', space=vmem, size = 0x4000, scoped, tag = 'input window, operand 0, single buffered']
    #allocation3 [shape = 's32[1]{0}', space=sflag, size = 0x4, scoped, tag = 'scoped memory for tpu_custom_call.1']
    #allocation4 [shape = 'u8[8192]{0}', space=vmem, size = 0x2000, scoped, tag = 'input window, operand 1, single buffered']
    #allocation5 [shape = 's32[1]{0}', space=sflag, size = 0x4, scoped, tag = 'scoped memory for tpu_custom_call.1']
    #allocation6 [shape = 'u8[32768]{0}', space=vmem, size = 0x8000, scoped, tag = 'input window, operand 2, single buffered']
    #allocation7 [shape = 'u8[1024]{0}', space=vmem, size = 0x400, scoped, tag = 'input window, operand 4, single buffered']
    #allocation8 [shape = 's32[1]{0}', space=sflag, size = 0x4, scoped, tag = 'scoped memory for tpu_custom_call.1']
    %10 = vsyncpa [#allocation3], 0
    %11 = vsyncpa [#allocation5], 0
    %12 = vsyncpa [#allocation8], 0
    // Predicated region
    $region2: #{tpu_custom_call.1} parent=1 // pred_check
      _
    $region3: #{tpu_custom_call.1} parent=1 // pred_check_branch
      %14 = sbr.rel (0) target = $region5
    $region4: #{tpu_custom_call.1} parent=1 // pred_region
      %16 = vsyncadd [#allocation3], 0
      %s17 = sshll.u32 %s0, 4
      %s18 = int_to_ptr.hbm [resolvable:$true] %s17
      %s19 = sshll.u32 [#allocation2], 4
      %s20 = int_to_ptr.vmem [resolvable:$true] %s19
      %25 = dma.hbm_to_vmem [thread:$0]  %s18, 512, %s20, [#allocation3], 128, 128, 8
    $region5: #{tpu_custom_call.1} parent=1 // pred_fallthru
      _
    // Predicated region
    $region6: #{tpu_custom_call.1} parent=1 // pred_check
      _
    $region7: #{tpu_custom_call.1} parent=1 // pred_check_branch
      %27 = sbr.rel (0) target = $region9
    $region8: #{tpu_custom_call.1} parent=1 // pred_region
      %29 = vsyncadd [#allocation5], 0
      %s30 = sshll.u32 %s1, 4
      %s31 = int_to_ptr.hbm [resolvable:$true] %s30
      %s32 = sshll.u32 [#allocation4], 4
      %s33 = int_to_ptr.vmem [resolvable:$true] %s32
      %38 = dma.hbm_to_vmem [thread:$0]  %s31, 256, %s33, [#allocation5], 128, 128, 8
    $region9: #{tpu_custom_call.1} parent=1 // pred_fallthru
      _
    // Predicated region
    $region10: #{tpu_custom_call.1} parent=1 // pred_check
      _
    $region11: #{tpu_custom_call.1} parent=1 // pred_check_branch
      %40 = sbr.rel (0) target = $region13
    $region12: #{tpu_custom_call.1} parent=1 // pred_region
      %42 = vsyncadd [#allocation5], 0
      %s43 = sshll.u32 %s2, 4
      %s44 = int_to_ptr.hbm [resolvable:$true] %s43
      %s45 = sshll.u32 [#allocation6], 4
      %s46 = int_to_ptr.vmem [resolvable:$true] %s45
      %51 = dma.hbm_to_vmem [thread:$0]  %s44, 1024, %s46, [#allocation5], 256, 256, 16
    $region13: #{tpu_custom_call.1} parent=1 // pred_fallthru
      _
    // Predicated region
    $region14: #{tpu_custom_call.1} parent=1 // pred_check
      _
    $region15: #{tpu_custom_call.1} parent=1 // pred_check_branch
      %53 = sbr.rel (0) target = $region17
    $region16: #{tpu_custom_call.1} parent=1 // pred_region
      _
    $region17: #{tpu_custom_call.1} parent=1 // pred_fallthru
      _
    // Predicated region
    $region18: #{tpu_custom_call.1} parent=1 // pred_check
      _
    $region19: #{tpu_custom_call.1} parent=1 // pred_check_branch
      %55 = sbr.rel (0) target = $region21
    $region20: #{tpu_custom_call.1} parent=1 // pred_region
      %57 = vsyncadd [#allocation8], 0
      %s59 = sshll.u32 %s4, 4
      %s60 = int_to_ptr.hbm [resolvable:$true] %s59
      %s61 = sshll.u32 [#allocation7], 4
      %s62 = int_to_ptr.vmem [resolvable:$true] %s61
      %64 = dma.hbm_to_vmem [thread:$0]  %s60, 32, %s62, [#allocation8]
    $region21: #{tpu_custom_call.1} parent=1 // pred_fallthru
      _
    // Predicated region
    $region22: #{tpu_custom_call.1} parent=1 // pred_check
      _
    $region23: #{tpu_custom_call.1} parent=1 // pred_check_branch
      %66 = sbr.rel (0) target = $region25
    $region24: #{tpu_custom_call.1} parent=1 // pred_region
      %68 = dma.done [#allocation3], 512
    $region25: #{tpu_custom_call.1} parent=1 // pred_fallthru
      _
    // Predicated region
    $region26: #{tpu_custom_call.1} parent=1 // pred_check
      _
    $region27: #{tpu_custom_call.1} parent=1 // pred_check_branch
      %70 = sbr.rel (0) target = $region29
    $region28: #{tpu_custom_call.1} parent=1 // pred_region
      %72 = dma.done [#allocation5], 256
    $region29: #{tpu_custom_call.1} parent=1 // pred_fallthru
      _
    // Predicated region
    $region30: #{tpu_custom_call.1} parent=1 // pred_check
      _
    $region31: #{tpu_custom_call.1} parent=1 // pred_check_branch
      %74 = sbr.rel (0) target = $region33
    $region32: #{tpu_custom_call.1} parent=1 // pred_region
      %76 = dma.done [#allocation5], 1024
    $region33: #{tpu_custom_call.1} parent=1 // pred_fallthru
      _
    // Predicated region
    $region34: #{tpu_custom_call.1} parent=1 // pred_check
      _
    $region35: #{tpu_custom_call.1} parent=1 // pred_check_branch
      %78 = sbr.rel (0) target = $region37
    $region36: #{tpu_custom_call.1} parent=1 // pred_region
      %80 = dma.done [#allocation8], 32
    $region37: #{tpu_custom_call.1} parent=1 // pred_fallthru
      _
    %v81 = vld [vmem:[#allocation2] sm:$0xff]
    %v82 = vld [vmem:[#allocation2 + $0x8] sm:$0xff]
    %v83 = vld [vmem:[#allocation2 + $0x10] sm:$0xff]
    %v84 = vld [vmem:[#allocation2 + $0x18] sm:$0xff]
    %v85 = vld [vmem:[#allocation4] sm:$0xff]
    %v86 = vld [vmem:[#allocation4 + $0x8] sm:$0xff]
    %v87 = vld [vmem:[#allocation6] sm:$0xff]
    %v88 = vld [vmem:[#allocation6 + $0x8] sm:$0xff]
    %v89 = vld [vmem:[#allocation6 + $0x10] sm:$0xff]
    %v90 = vld [vmem:[#allocation6 + $0x18] sm:$0xff]
    %v91 = vld [vmem:[#allocation6 + $0x20] sm:$0xff]
    %v92 = vld [vmem:[#allocation6 + $0x28] sm:$0xff]
    %v93 = vld [vmem:[#allocation6 + $0x30] sm:$0xff]
    %v94 = vld [vmem:[#allocation6 + $0x38] sm:$0xff]
    %v95 = vld [vmem:[%s3] sm:$0x3]
    %v97 = vperm.slane %v95, 0
    %v98 = vperm.slane %v95, 1
    %vm101 = vcmask 261120
    %v103 = vsel %vm101, %v81, 0
    %v106 = vsel %vm101, %v82, 0
    %v109 = vsel %vm101, %v83, 0
    %v112 = vsel %vm101, %v84, 0
    %v115 = vsel %vm101, %v85, 0
    %v118 = vsel %vm101, %v86, 0
    %120 = vmatpush.msra.mxu0 0.0
    %121 = vmatpush.msra.mxu0 0.0
    %122 = vmatpush.msra.mxu0 0.0
    %123 = vmatpush.msra.mxu0 0.0
    %124 = vmatpush.msra.mxu0 0.0
    %125 = vmatpush.msra.mxu0 0.0
    %126 = vmatpush.msra.mxu0 0.0
    %127 = vmatpush.msra.mxu0 0.0
    %128 = vmatpush.msra.mxu0 0.0
    %129 = vmatpush.msra.mxu0 0.0
    %130 = vmatpush.msra.mxu0 0.0
    %131 = vmatpush.msra.mxu0 0.0
    %132 = vmatpush.msra.mxu0 %v93
    %133 = vmatpush.msra.mxu0 %v91
    %134 = vmatpush.msra.mxu0 %v89
    %135 = vmatpush.msra.mxu0 %v87
    %136 = vmatmul.f32.gmra.mxu0 %v103
    %v137 = vpop.f32.mrf.mxu0
    %v138 = vadd.f32 %v97, %v137
    %139 = vmatmul.f32.gmra.mxu0 %v106
    %v140 = vpop.f32.mrf.mxu0
    %v141 = vadd.f32 %v97, %v140
    %142 = vmatmul.f32.gmra.mxu0 %v109
    %v143 = vpop.f32.mrf.mxu0
    %v144 = vadd.f32 %v97, %v143
    %145 = vmatmul.f32.gmra.mxu0 %v112
    %v146 = vpop.f32.mrf.mxu0
    %v147 = vadd.f32 %v97, %v146
    %148 = vmatmul.f32.gmra.mxu0 %v115
    %v149 = vpop.f32.mrf.mxu0
    %150 = vmatmul.f32.gmra.mxu0 %v118
    %v151 = vpop.f32.mrf.mxu0
    %152 = vdwg.mxu0
    %153 = vmatpush.msra.mxu0 0.0
    %154 = vmatpush.msra.mxu0 0.0
    %155 = vmatpush.msra.mxu0 0.0
    %156 = vmatpush.msra.mxu0 0.0
    %157 = vmatpush.msra.mxu0 0.0
    %158 = vmatpush.msra.mxu0 0.0
    %159 = vmatpush.msra.mxu0 0.0
    %160 = vmatpush.msra.mxu0 0.0
    %161 = vmatpush.msra.mxu0 0.0
    %162 = vmatpush.msra.mxu0 0.0
    %163 = vmatpush.msra.mxu0 0.0
    %164 = vmatpush.msra.mxu0 0.0
    %165 = vmatpush.msra.mxu0 %v94
    %166 = vmatpush.msra.mxu0 %v92
    %167 = vmatpush.msra.mxu0 %v90
    %168 = vmatpush.msra.mxu0 %v88
    %169 = vmatmul.f32.gmra.mxu0 %v103
    %v170 = vpop.f32.mrf.mxu0
    %171 = vmatmul.f32.gmra.mxu0 %v106
    %v172 = vpop.f32.mrf.mxu0
    %173 = vmatmul.f32.gmra.mxu0 %v109
    %v174 = vpop.f32.mrf.mxu0
    %175 = vmatmul.f32.gmra.mxu0 %v112
    %v176 = vpop.f32.mrf.mxu0
    %177 = vmatmul.f32.gmra.mxu0 %v115
    %v178 = vpop.f32.mrf.mxu0
    %v179 = vadd.f32 %v98, %v178
    %180 = vmatmul.f32.gmra.mxu0 %v118
    %v181 = vpop.f32.mrf.mxu0
    %v182 = vadd.f32 %v98, %v181
    %183 = vdwg.mxu0
    %v184 = vmax.f32 %v138, 0.0
    %v185 = vmax.f32 %v141, 0.0
    %v186 = vmax.f32 %v144, 0.0
    %v187 = vmax.f32 %v147, 0.0
    %v188 = vmax.f32 %v179, 0.0
    %v189 = vmax.f32 %v182, 0.0
    %v190 = vld [vmem:[#allocation7] sm:$0x3]
    %v192 = vrot.slane %v190, 1
    %v193 = vperm.slane %v190, 0
    %v194 = vperm.slane %v192, 0
    %v197 = vmul.f32 %v184, %v193
    %v198 = vmul.f32 %v185, %v193
    %v199 = vmul.f32 %v184, %v194
    %v200 = vmul.f32 %v185, %v194
    %v201 = vmul.f32 %v186, %v193
    %v202 = vmul.f32 %v187, %v193
    %v203 = vmul.f32 %v186, %v194
    %v204 = vmul.f32 %v187, %v194
    %205 = vmatpush.xpose.msra.mxu0 0.0
    %206 = vmatpush.xpose.msra.mxu0 0.0
    %207 = vmatpush.xpose.msra.mxu0 0.0
    %208 = vmatpush.xpose.msra.mxu0 0.0
    %209 = vmatpush.xpose.msra.mxu0 0.0
    %210 = vmatpush.xpose.msra.mxu0 0.0
    %211 = vmatpush.xpose.msra.mxu0 0.0
    %212 = vmatpush.xpose.msra.mxu0 0.0
    %213 = vmatpush.xpose.msra.mxu0 0.0
    %214 = vmatpush.xpose.msra.mxu0 0.0
    %215 = vmatpush.xpose.msra.mxu0 0.0
    %216 = vmatpush.xpose.msra.mxu0 0.0
    %217 = vmatpush.xpose.msra.mxu0 0.0
    %218 = vmatpush.xpose.msra.mxu0 0.0
    %219 = vmatpush.xpose.msra.mxu0 0.0
    %220 = vmatpush.xpose.msra.mxu0 %v188
    %221 = vmatmul.f32.gmra.mxu0 %v197
    %v222 = vpop.f32.mrf.mxu0
    %v223 = vadd.f32 0.0, %v222
    %224 = vmatmul.f32.gmra.mxu0 %v198
    %v225 = vpop.f32.mrf.mxu0
    %v226 = vadd.f32 0.0, %v225
    %227 = vmatmul.f32.gmra.mxu0 %v199
    %v228 = vpop.f32.mrf.mxu0
    %v229 = vadd.f32 0.0, %v228
    %230 = vmatmul.f32.gmra.mxu0 %v200
    %v231 = vpop.f32.mrf.mxu0
    %v232 = vadd.f32 0.0, %v231
    %233 = vdwg.mxu0
    %234 = vmatpush.xpose.msra.mxu0 0.0
    %235 = vmatpush.xpose.msra.mxu0 0.0
    %236 = vmatpush.xpose.msra.mxu0 0.0
    %237 = vmatpush.xpose.msra.mxu0 0.0
    %238 = vmatpush.xpose.msra.mxu0 0.0
    %239 = vmatpush.xpose.msra.mxu0 0.0
    %240 = vmatpush.xpose.msra.mxu0 0.0
    %241 = vmatpush.xpose.msra.mxu0 0.0
    %242 = vmatpush.xpose.msra.mxu0 0.0
    %243 = vmatpush.xpose.msra.mxu0 0.0
    %244 = vmatpush.xpose.msra.mxu0 0.0
    %245 = vmatpush.xpose.msra.mxu0 0.0
    %246 = vmatpush.xpose.msra.mxu0 0.0
    %247 = vmatpush.xpose.msra.mxu0 0.0
    %248 = vmatpush.xpose.msra.mxu0 0.0
    %249 = vmatpush.xpose.msra.mxu0 %v189
    %250 = vmatmul.f32.gmra.mxu0 %v201
    %v251 = vpop.f32.mrf.mxu0
    %v252 = vadd.f32 0.0, %v251
    %253 = vmatmul.f32.gmra.mxu0 %v202
    %v254 = vpop.f32.mrf.mxu0
    %v255 = vadd.f32 0.0, %v254
    %256 = vmatmul.f32.gmra.mxu0 %v203
    %v257 = vpop.f32.mrf.mxu0
    %v258 = vadd.f32 0.0, %v257
    %259 = vmatmul.f32.gmra.mxu0 %v204
    %v260 = vpop.f32.mrf.mxu0
    %v261 = vadd.f32 0.0, %v260
    %262 = vdwg.mxu0
    %vm263 = vcmask 64512
    %v264 = vsel %vm263, %v223, -inf
    %265 = vmax.xlane.f32.xlu0 %v264
    %v266 = vpop.xlane.xlu0 %265
    %v267 = vsel %vm263, %v226, -inf
    %268 = vmax.xlane.f32.xlu0 %v267
    %v269 = vpop.xlane.xlu0 %268
    %v270 = vsel %vm263, %v229, -inf
    %271 = vmax.xlane.f32.xlu0 %v270
    %v272 = vpop.xlane.xlu0 %271
    %v273 = vsel %vm263, %v232, -inf
    %274 = vmax.xlane.f32.xlu0 %v273
    %v275 = vpop.xlane.xlu0 %274
    %v276 = vsel %vm263, %v252, -inf
    %277 = vmax.xlane.f32.xlu0 %v276
    %v278 = vpop.xlane.xlu0 %277
    %v279 = vsel %vm263, %v255, -inf
    %280 = vmax.xlane.f32.xlu0 %v279
    %v281 = vpop.xlane.xlu0 %280
    %v282 = vsel %vm263, %v258, -inf
    %283 = vmax.xlane.f32.xlu0 %v282
    %v284 = vpop.xlane.xlu0 %283
    %v285 = vsel %vm263, %v261, -inf
    %286 = vmax.xlane.f32.xlu0 %v285
    %v287 = vpop.xlane.xlu0 %286
    %v288 = vmax.f32 %v266, %v269
    %v289 = vrot.slane %v288, 4
    %v290 = vmax.f32 %v288, %v289
    %v291 = vrot.slane %v290, 2
    %v292 = vmax.f32 %v290, %v291
    %v293 = vrot.slane %v292, 1
    %v294 = vmax.f32 %v292, %v293
    %v295 = vmax.f32 %v272, %v275
    %v296 = vrot.slane %v295, 4
    %v297 = vmax.f32 %v295, %v296
    %v298 = vrot.slane %v297, 2
    %v299 = vmax.f32 %v297, %v298
    %v300 = vrot.slane %v299, 1
    %v301 = vmax.f32 %v299, %v300
    %v302 = vmax.f32 %v278, %v281
    %v303 = vrot.slane %v302, 4
    %v304 = vmax.f32 %v302, %v303
    %v305 = vrot.slane %v304, 2
    %v306 = vmax.f32 %v304, %v305
    %v307 = vrot.slane %v306, 1
    %v308 = vmax.f32 %v306, %v307
    %v309 = vmax.f32 %v284, %v287
    %v310 = vrot.slane %v309, 4
    %v311 = vmax.f32 %v309, %v310
    %v312 = vrot.slane %v311, 2
    %v313 = vmax.f32 %v311, %v312
    %v314 = vrot.slane %v313, 1
    %v315 = vmax.f32 %v313, %v314
    %v316 = vsub.f32 %v223, %v294
    %v317 = vsub.f32 %v226, %v294
    %v318 = vsub.f32 %v229, %v301
    %v319 = vsub.f32 %v232, %v301
    %v320 = vsub.f32 %v252, %v308
    %v321 = vsub.f32 %v255, %v308
    %v322 = vsub.f32 %v258, %v315
    %v323 = vsub.f32 %v261, %v315
    %v324 = vmul.f32 %v316, 1.442695
    %v325 = vpow.pop %v324
    %v326 = vmul.f32 %v317, 1.442695
    %v327 = vpow.pop %v326
    %v328 = vmul.f32 %v318, 1.442695
    %v329 = vpow.pop %v328
    %v330 = vmul.f32 %v319, 1.442695
    %v331 = vpow.pop %v330
    %v332 = vmul.f32 %v320, 1.442695
    %v333 = vpow.pop %v332
    %v334 = vmul.f32 %v321, 1.442695
    %v335 = vpow.pop %v334
    %v336 = vmul.f32 %v322, 1.442695
    %v337 = vpow.pop %v336
    %v338 = vmul.f32 %v323, 1.442695
    %v339 = vpow.pop %v338
    %v340 = vsel %vm263, %v325, 0.0
    %341 = vadd.xlane.f32.xlu0 %v340
    %v342 = vpop.xlane.xlu0 %341
    %v343 = vsel %vm263, %v327, 0.0
    %344 = vadd.xlane.f32.xlu0 %v343
    %v345 = vpop.xlane.xlu0 %344
    %v346 = vsel %vm263, %v329, 0.0
    %347 = vadd.xlane.f32.xlu0 %v346
    %v348 = vpop.xlane.xlu0 %347
    %v349 = vsel %vm263, %v331, 0.0
    %350 = vadd.xlane.f32.xlu0 %v349
    %v351 = vpop.xlane.xlu0 %350
    %v352 = vsel %vm263, %v333, 0.0
    %353 = vadd.xlane.f32.xlu0 %v352
    %v354 = vpop.xlane.xlu0 %353
    %v355 = vsel %vm263, %v335, 0.0
    %356 = vadd.xlane.f32.xlu0 %v355
    %v357 = vpop.xlane.xlu0 %356
    %v358 = vsel %vm263, %v337, 0.0
    %359 = vadd.xlane.f32.xlu0 %v358
    %v360 = vpop.xlane.xlu0 %359
    %v361 = vsel %vm263, %v339, 0.0
    %362 = vadd.xlane.f32.xlu0 %v361
    %v363 = vpop.xlane.xlu0 %362
    %v364 = vadd.f32 %v342, %v345
    %v365 = vrot.slane %v364, 4
    %v366 = vadd.f32 %v364, %v365
    %v367 = vrot.slane %v366, 2
    %v368 = vadd.f32 %v366, %v367
    %v369 = vrot.slane %v368, 1
    %v370 = vadd.f32 %v368, %v369
    %v371 = vadd.f32 %v348, %v351
    %v372 = vrot.slane %v371, 4
    %v373 = vadd.f32 %v371, %v372
    %v374 = vrot.slane %v373, 2
    %v375 = vadd.f32 %v373, %v374
    %v376 = vrot.slane %v375, 1
    %v377 = vadd.f32 %v375, %v376
    %v378 = vadd.f32 %v354, %v357
    %v379 = vrot.slane %v378, 4
    %v380 = vadd.f32 %v378, %v379
    %v381 = vrot.slane %v380, 2
    %v382 = vadd.f32 %v380, %v381
    %v383 = vrot.slane %v382, 1
    %v384 = vadd.f32 %v382, %v383
    %v385 = vadd.f32 %v360, %v363
    %v386 = vrot.slane %v385, 4
    %v387 = vadd.f32 %v385, %v386
    %v388 = vrot.slane %v387, 2
    %v389 = vadd.f32 %v387, %v388
    %v390 = vrot.slane %v389, 1
    %v391 = vadd.f32 %v389, %v390
    %v392 = vrcp.pop %v370
    %v393 = vrcp.pop %v377
    %v394 = vrcp.pop %v384
    %v395 = vrcp.pop %v391
    %v396 = vmul.f32 %v370, %v392
    %v397 = vmul.f32 %v377, %v393
    %v398 = vmul.f32 %v384, %v394
    %v399 = vmul.f32 %v391, %v395
    %v400 = vsub.f32 2.0, %v396
    %v401 = vsub.f32 2.0, %v397
    %v402 = vsub.f32 2.0, %v398
    %v403 = vsub.f32 2.0, %v399
    %v404 = vmul.f32 %v392, %v400
    %v405 = vmul.f32 %v393, %v401
    %v406 = vmul.f32 %v394, %v402
    %v407 = vmul.f32 %v395, %v403
    %v408 = vmul.f32 %v325, %v404
    %v409 = vmul.f32 %v327, %v404
    %v410 = vmul.f32 %v329, %v405
    %v411 = vmul.f32 %v331, %v405
    %v412 = vmul.f32 %v333, %v406
    %v413 = vmul.f32 %v335, %v406
    %v414 = vmul.f32 %v337, %v407
    %v415 = vmul.f32 %v339, %v407
    %416 = vst.msk [vmem:[%s5] sm:$0xff] %vm263, %v408
    %417 = vst.msk [vmem:[%s5 + $0x8] sm:$0xff] %vm263, %v409
    %418 = vst.msk [vmem:[%s5 + $0x10] sm:$0xff] %vm263, %v410
    %419 = vst.msk [vmem:[%s5 + $0x18] sm:$0xff] %vm263, %v411
    %420 = vst.msk [vmem:[%s5 + $0x20] sm:$0xff] %vm263, %v412
    %421 = vst.msk [vmem:[%s5 + $0x28] sm:$0xff] %vm263, %v413
    %422 = vst.msk [vmem:[%s5 + $0x30] sm:$0xff] %vm263, %v414
    %423 = vst.msk [vmem:[%s5 + $0x38] sm:$0xff] %vm263, %v415
    // Predicated region
    $region38: #{tpu_custom_call.1} parent=1 // pred_check
      _
    $region39: #{tpu_custom_call.1} parent=1 // pred_check_branch
      %425 = sbr.rel (0) target = $region41
    $region40: #{tpu_custom_call.1} parent=1 // pred_region
      _
    $region41: #{tpu_custom_call.1} parent=1 // pred_fallthru
      _
    // Predicated region
    $region42: #{tpu_custom_call.1} parent=1 // pred_check
      _
    $region43: #{tpu_custom_call.1} parent=1 // pred_check_branch
      %427 = sbr.rel (0) target = $region45
    $region44: #{tpu_custom_call.1} parent=1 // pred_region
      _
    $region45: #{tpu_custom_call.1} parent=1 // pred_fallthru
      _
    %428 = vsyncpa [#allocation3], 1
    %429 = vsyncpa [#allocation5], 1
    %430 = vsyncpa [#allocation8], 1

</llo_original>
